<compile_context>
chip_gen: v7x
topology: tpu7x:2x2x1
jax: 0.10.0
libtpu: 0.0.40
codegen_flags: <defaults>
</compile_context>

<pallas_src>
import functools

import jax
import jax.numpy as jnp
from jax.experimental import pallas as pl
from jax.experimental.pallas import tpu as pltpu


def _basic_block_kernel(xe_hbm, w1_ref, b1_ref, w2_ref, wsc_ref, bf_ref,
                        o_ref, xbuf, copy_sem, *, TL, stride, L_out,
                        has_shortcut):
    """One (batch element, L_out tile) per grid step.

    xe_hbm : (N, L + stride + 3, Cp) channel/halo padded input, HBM (pl.ANY)
    w1_ref : (3*Cp, Pp)   conv1 weight, bn1-folded, im2col-flat (tap-major)
    b1_ref : (1, Pp)      bn1 folded shift
    w2_ref : (3, Pp, Pp)  conv2 weight, bn2-folded (tap-major)
    wsc_ref: (Cp, Pp)     1x1 shortcut conv weight, bn-folded (unused if identity)
    bf_ref : (1, Pp)      combined bias (bn2 shift + folded shortcut bias)
    o_ref  : (1, TL, Pp)
    xbuf   : ((TL+1)*stride + 3, Cp) VMEM scratch for the halo'd input window
    """
    n = pl.program_id(0)          # batch element
    t = pl.program_id(1)          # L_out tile index
    W = xbuf.shape[0]

    row0 = t * (TL * stride)
    if (TL * stride) % 8 == 0:
        row0 = pl.multiple_of(row0, 8)

    # Manual DMA of the exact halo'd input window for this (batch, tile).
    cp = pltpu.make_async_copy(xe_hbm.at[n, pl.ds(row0, W), :], xbuf, copy_sem)
    cp.start()
    cp.wait()
    # TODO(synk): double-buffer xbuf across the L_out-tile axis to hide this DMA.

    def rows(start, count):
        if stride == 1:
            return xbuf[pl.ds(start, count), :]
        return xbuf[pl.ds(start, count, stride=stride), :]

    # ---- conv1 (+ folded bn1) + relu, computed for TL+2 positions (1 halo) --
    # im2col: the 3 taps stacked on the lane axis -> a single K = 3*Cp matmul.
    xc = jnp.concatenate([rows(0, TL + 2), rows(1, TL + 2), rows(2, TL + 2)],
                         axis=-1)                                # (TL+2, 3*Cp)
    h = jnp.dot(xc, w1_ref[...], preferred_element_type=jnp.float32)
    h = jnp.maximum(h + b1_ref[...], 0.0)                        # (TL+2, Pp)

    # Halo rows that fall outside [0, L_out) are conv2's zero padding.
    Pp = h.shape[1]
    jglob = jax.lax.broadcasted_iota(jnp.int32, (TL + 2, Pp), 0) + (t * TL - 1)
    h = jnp.where((jglob >= 0) & (jglob < L_out), h, 0.0)

    # ---- conv2 (+ folded bn2): three static tap slices of the halo'd h ------
    acc = jnp.dot(h[0:TL, :], w2_ref[0], preferred_element_type=jnp.float32)
    acc = acc + jnp.dot(h[1:TL + 1, :], w2_ref[1],
                        preferred_element_type=jnp.float32)
    acc = acc + jnp.dot(h[2:TL + 2, :], w2_ref[2],
                        preferred_element_type=jnp.float32)

    # ---- shortcut: 1x1 strided conv (+ folded bn) or identity ---------------
    xs = rows(stride + 1, TL)                    # x[:, ::stride] for this tile
    if has_shortcut:
        sc = jnp.dot(xs, wsc_ref[...], preferred_element_type=jnp.float32)
    else:
        sc = xs                                  # Cp == Pp in the identity case

    # ---- residual add (+ combined bias) + relu ------------------------------
    o_ref[0] = jnp.maximum(acc + sc + bf_ref[...], 0.0).astype(o_ref.dtype)


def _round_up(v, m):
    return (v + m - 1) // m * m


def _fold_bn(gamma, beta, mean, var, eps=1e-5):
    scale = gamma / jnp.sqrt(var + eps)
    shift = beta - mean * scale
    return scale, shift


def basic_block_forward(x_ncl, params, stride, tile_len=None):
    """x_ncl: (N, Cin, L) float32 (PyTorch NCL). Returns (N, planes, L_out)."""
    N, Cin, L = x_ncl.shape
    planes = params["w1"].shape[0]
    assert L % stride == 0, "kernel assumes stride divides L"
    L_out = L // stride
    has_shortcut = (stride != 1) or (Cin != planes)

    # Pad channels to the 128-lane width: full MXU width + unmasked stores.
    Cp = _round_up(Cin, 128)
    Pp = _round_up(planes, 128)

    # L_out tile (second grid axis). Must divide L_out and be 8-aligned (or
    # equal L_out).  Cap should be re-derived per generation if VMEM-bound
    # (v7x has 64 MiB physical VMEM vs 128 MiB on v5e/v6e).
    if tile_len is None:
        tile_len = L_out
        if L_out % 8 == 0:
            for cand in range(8, min(L_out, 512) + 1, 8):
                if L_out % cand == 0:
                    tile_len = cand
    TL = tile_len
    assert L_out % TL == 0 and (TL % 8 == 0 or TL == L_out)
    n_lt = L_out // TL

    # ---- input: NCL -> NLC, length halo pad, channel pad to Cp (one copy). --
    pad_l = stride + 1            # conv1's pad(1) + left halo reach (stride)
    pad_r = 2                     # right halo reach
    x_nlc = jnp.transpose(x_ncl, (0, 2, 1)).astype(jnp.float32)
    xe = jnp.pad(x_nlc, ((0, 0), (pad_l, pad_r), (0, Cp - Cin)))
    W = (TL + 1) * stride + 3     # input-window rows per tile (with halo)

    # ---- fold eval-mode BatchNorm into the conv weights / biases. -----------
    s1, b1 = _fold_bn(params["bn1_g"], params["bn1_b"], params["bn1_m"], params["bn1_v"])
    s2, b2 = _fold_bn(params["bn2_g"], params["bn2_b"], params["bn2_m"], params["bn2_v"])

    w1 = jnp.transpose(params["w1"], (2, 1, 0)) * s1[None, None, :]   # (3,Cin,P)
    w1 = jnp.pad(w1, ((0, 0), (0, Cp - Cin), (0, Pp - planes)))
    w1 = w1.reshape(3 * Cp, Pp)                                       # im2col-flat
    w2 = jnp.transpose(params["w2"], (2, 1, 0)) * s2[None, None, :]   # (3,P,P)
    w2 = jnp.pad(w2, ((0, 0), (0, Pp - planes), (0, Pp - planes)))
    b1p = jnp.pad(b1, (0, Pp - planes))[None, :]

    b_final = b2
    if has_shortcut:
        ssc, bscn = _fold_bn(params["bnsc_g"], params["bnsc_b"],
                             params["bnsc_m"], params["bnsc_v"])
        wsc = jnp.transpose(params["wsc"][:, :, 0], (1, 0)) * ssc[None, :]
        wsc = jnp.pad(wsc, ((0, Cp - Cin), (0, Pp - planes)))
        b_final = b_final + params["bsc"] * ssc + bscn
    else:
        wsc = jnp.zeros((Cp, Pp), jnp.float32)     # unused by the kernel
    bfp = jnp.pad(b_final, (0, Pp - planes))[None, :]

    kernel = functools.partial(_basic_block_kernel, TL=TL, stride=stride,
                               L_out=L_out, has_shortcut=has_shortcut)
    fixed2 = lambda n, t: (0, 0)
    fixed3 = lambda n, t: (0, 0, 0)

    out_nlc = pl.pallas_call(
        kernel,
        out_shape=jax.ShapeDtypeStruct((N, L_out, Pp), jnp.float32),
        grid=(N, n_lt),
        in_specs=[
            pl.BlockSpec(memory_space=pl.ANY),                # xe: manual halo DMA
            pl.BlockSpec((3 * Cp, Pp), fixed2),               # w1 (folded, im2col)
            pl.BlockSpec((1, Pp), fixed2),                    # bn1 shift
            pl.BlockSpec((3, Pp, Pp), fixed3),                # w2 (folded)
            pl.BlockSpec((Cp, Pp), fixed2),                   # wsc (folded)
            pl.BlockSpec((1, Pp), fixed2),                    # combined bias
        ],
        out_specs=pl.BlockSpec((1, TL, Pp), lambda n, t: (n, t, 0)),
        scratch_shapes=[
            pltpu.VMEM((W, Cp), jnp.float32),
            pltpu.SemaphoreType.DMA(()),
        ],
        compiler_params=pltpu.CompilerParams(
            dimension_semantics=("parallel", "parallel"),
            vmem_limit_bytes=32 * 1024 * 1024),
    )(xe, w1, b1p, w2, wsc, bfp)

    # TODO(synk): stacked blocks should keep the padded NLC layout between
    # blocks instead of transposing back to NCL after every block.
    return jnp.transpose(out_nlc[:, :, :planes], (0, 2, 1))


def reference_forward(x_ncl, params, stride):
    """Pure-JAX reference (eval-mode BatchNorm), mirrors the PyTorch module."""
    N, Cin, L = x_ncl.shape
    planes = params["w1"].shape[0]
    L_out = L // stride
    x = jnp.transpose(x_ncl, (0, 2, 1))                     # NLC
    xpad = jnp.pad(x, ((0, 0), (1, 1), (0, 0)))
    w1 = jnp.transpose(params["w1"], (2, 1, 0))
    w2 = jnp.transpose(params["w2"], (2, 1, 0))
    s1, b1 = _fold_bn(params["bn1_g"], params["bn1_b"], params["bn1_m"], params["bn1_v"])
    s2, b2 = _fold_bn(params["bn2_g"], params["bn2_b"], params["bn2_m"], params["bn2_v"])

    c1 = sum(jnp.einsum('nlc,cp->nlp', xpad[:, k:k + L], w1[k]) for k in range(3))
    c1 = c1[:, ::stride]
    h = jnp.maximum(c1 * s1[None, None, :] + b1[None, None, :], 0.0)
    hpad = jnp.pad(h, ((0, 0), (1, 1), (0, 0)))
    c2 = sum(jnp.einsum('nlc,cp->nlp', hpad[:, k:k + L_out], w2[k]) for k in range(3))
    out = c2 * s2[None, None, :] + b2[None, None, :]

    if stride != 1 or Cin != planes:
        wsc = jnp.transpose(params["wsc"][:, :, 0], (1, 0))
        ssc, bscn = _fold_bn(params["bnsc_g"], params["bnsc_b"],
                             params["bnsc_m"], params["bnsc_v"])
        sc = jnp.einsum('nlc,cp->nlp', x[:, ::stride], wsc) + params["bsc"][None, None, :]
        sc = sc * ssc[None, None, :] + bscn[None, None, :]
    else:
        sc = x[:, ::stride]
    return jnp.transpose(jnp.maximum(out + sc, 0.0), (0, 2, 1))


def make_params(key, in_planes, planes):
    ks = jax.random.split(key, 12)
    return {
        "w1": 0.1 * jax.random.normal(ks[0], (planes, in_planes, 3), jnp.float32),
        "w2": 0.1 * jax.random.normal(ks[1], (planes, planes, 3), jnp.float32),
        "wsc": 0.1 * jax.random.normal(ks[2], (planes, in_planes, 1), jnp.float32),
        "bsc": 0.1 * jax.random.normal(ks[3], (planes,), jnp.float32),
        "bn1_g": 1.0 + 0.1 * jax.random.normal(ks[4], (planes,), jnp.float32),
        "bn1_b": 0.1 * jax.random.normal(ks[5], (planes,), jnp.float32),
        "bn1_m": 0.05 * jax.random.normal(ks[6], (planes,), jnp.float32),
        "bn1_v": 1.0 + 0.1 * jax.random.uniform(ks[7], (planes,), jnp.float32),
        "bn2_g": 1.0 + 0.1 * jax.random.normal(ks[8], (planes,), jnp.float32),
        "bn2_b": 0.1 * jax.random.normal(ks[9], (planes,), jnp.float32),
        "bn2_m": 0.05 * jax.random.normal(ks[10], (planes,), jnp.float32),
        "bn2_v": 1.0 + 0.1 * jax.random.uniform(ks[11], (planes,), jnp.float32),
        "bnsc_g": jnp.ones((planes,), jnp.float32),
        "bnsc_b": jnp.zeros((planes,), jnp.float32),
        "bnsc_m": jnp.zeros((planes,), jnp.float32),
        "bnsc_v": jnp.ones((planes,), jnp.float32),
    }


if __name__ == "__main__":
    key = jax.random.PRNGKey(0)
    k_x, k_p = jax.random.split(key)

    # Small shapes; L chosen so the L_out-tiling path (2 tiles of 8) is exercised.
    N, in_planes, planes, L, stride = 2, 4, 8, 32, 2
    x = jax.random.normal(k_x, (N, in_planes, L), jnp.float32)   # PyTorch NCL
    params = make_params(k_p, in_planes, planes)

    out = jax.block_until_ready(basic_block_forward(x, params, stride, tile_len=8))
    ref = jax.block_until_ready(reference_forward(x, params, stride))

    assert out.shape == (N, planes, L // stride), out.shape
    assert jnp.allclose(out, ref, atol=1e-4, rtol=1e-4), float(jnp.max(jnp.abs(out - ref)))

    print("KERNEL_OK")
</pallas_src>

<mosaic_0001>
module attributes {stable_mosaic.version = 11 : i64} {
  func.func @_basic_block_kernel(%arg0: i32, %arg1: i32, %arg2: memref<2x37x128xf32, #tpu.memory_space<any>>, %arg3: memref<384x128xf32, #tpu.memory_space<vmem>>, %arg4: memref<1x128xf32, #tpu.memory_space<vmem>>, %arg5: memref<3x128x128xf32, #tpu.memory_space<vmem>>, %arg6: memref<128x128xf32, #tpu.memory_space<vmem>>, %arg7: memref<1x128xf32, #tpu.memory_space<vmem>>, %arg8: memref<1x8x128xf32, #tpu.memory_space<vmem>>, %arg9: memref<21x128xf32, #tpu.memory_space<vmem>>, %arg10: memref<!tpu.dma_semaphore, #tpu.memory_space<semaphore_mem>>) attributes {dimension_semantics = [#tpu.dimension_semantics<parallel>, #tpu.dimension_semantics<parallel>], iteration_bounds = array<i64: 2, 2>, scalar_prefetch = 0 : i64, scratch_operands = 2 : i64, tpu.core_type = #tpu.core_type<tc>, window_params = [{}, {pipeline_mode = #tpu.pipeline_mode<synchronous>, transform_indices = @transform_1, window_bounds = array<i64: 384, 128>}, {pipeline_mode = #tpu.pipeline_mode<synchronous>, transform_indices = @transform_2, window_bounds = array<i64: 1, 128>}, {pipeline_mode = #tpu.pipeline_mode<synchronous>, transform_indices = @transform_3, window_bounds = array<i64: 3, 128, 128>}, {pipeline_mode = #tpu.pipeline_mode<synchronous>, transform_indices = @transform_4, window_bounds = array<i64: 128, 128>}, {pipeline_mode = #tpu.pipeline_mode<synchronous>, transform_indices = @transform_5, window_bounds = array<i64: 1, 128>}, {transform_indices = @transform_6, window_bounds = array<i64: 1, 8, 128>}]} {
    %c16_i32 = arith.constant 16 : i32
    %0 = arith.muli %arg1, %c16_i32 : i32
    %1 = tpu.assume_multiple %0, 8 : i32
    %c0_i32 = arith.constant 0 : i32
    %2 = tpu.memref_slice %arg2[%arg0, %1, %c0_i32] : memref<2x37x128xf32, #tpu.memory_space<any>> -> memref<1x21x128xf32, #tpu.memory_space<any>>
    %3 = tpu.memref_squeeze %2 : memref<1x21x128xf32, #tpu.memory_space<any>> -> memref<21x128xf32, #tpu.memory_space<any>>
    tpu.enqueue_dma source(%3 : memref<21x128xf32, #tpu.memory_space<any>>) target(%arg9 : memref<21x128xf32, #tpu.memory_space<vmem>>) target_semaphore(%arg10 : memref<!tpu.dma_semaphore, #tpu.memory_space<semaphore_mem>>)
    %c0_i32_0 = arith.constant 0 : i32
    %4 = tpu.memref_slice %arg2[%arg0, %1, %c0_i32_0] : memref<2x37x128xf32, #tpu.memory_space<any>> -> memref<1x21x128xf32, #tpu.memory_space<any>>
    %5 = tpu.memref_squeeze %4 : memref<1x21x128xf32, #tpu.memory_space<any>> -> memref<21x128xf32, #tpu.memory_space<any>>
    tpu.wait_dma2 semaphore(%arg10 : memref<!tpu.dma_semaphore, #tpu.memory_space<semaphore_mem>>) src(%5 : memref<21x128xf32, #tpu.memory_space<any>>) dst(%arg9 : memref<21x128xf32, #tpu.memory_space<vmem>>)
    %c0 = arith.constant 0 : index
    %c0_1 = arith.constant 0 : index
    %6 = tpu.strided_load %arg9[%c0, %c0_1] {strides = array<i32: 2, 1>} : memref<21x128xf32, #tpu.memory_space<vmem>>, vector<10x128xf32>
    %c1 = arith.constant 1 : index
    %c0_2 = arith.constant 0 : index
    %7 = tpu.strided_load %arg9[%c1, %c0_2] {strides = array<i32: 2, 1>} : memref<21x128xf32, #tpu.memory_space<vmem>>, vector<10x128xf32>
    %c2 = arith.constant 2 : index
    %c0_3 = arith.constant 0 : index
    %8 = tpu.strided_load %arg9[%c2, %c0_3] {strides = array<i32: 2, 1>} : memref<21x128xf32, #tpu.memory_space<vmem>>, vector<10x128xf32>
    %9 = tpu.concatenate %6, %7, %8 in 1 : vector<10x128xf32>, vector<10x128xf32>, vector<10x128xf32> -> vector<10x384xf32>
    %c0_4 = arith.constant 0 : index
    %c0_5 = arith.constant 0 : index
    %10 = vector.load %arg3[%c0_4, %c0_5] : memref<384x128xf32, #tpu.memory_space<vmem>>, vector<384x128xf32>
    %cst = arith.constant dense<0.000000e+00> : vector<10x128xf32>
    %11 = tpu.matmul %9, %10, %cst {dimension_numbers = #tpu.dot_dimension_numbers<[1], [0], [0], [1], [0, 0, 1, 1], [], []>} : vector<10x384xf32>, vector<384x128xf32>, vector<10x128xf32> -> vector<10x128xf32>
    %c0_6 = arith.constant 0 : index
    %c0_7 = arith.constant 0 : index
    %12 = vector.load %arg4[%c0_6, %c0_7] : memref<1x128xf32, #tpu.memory_space<vmem>>, vector<1x128xf32>
    %13 = vector.broadcast %12 : vector<1x128xf32> to vector<10x128xf32>
    %14 = arith.addf %11, %13 : vector<10x128xf32>
    %cst_8 = arith.constant 0.000000e+00 : f32
    %15 = vector.broadcast %cst_8 : f32 to vector<10x128xf32>
    %16 = arith.maximumf %14, %15 : vector<10x128xf32>
    %17 = tpu.iota {dimensions = array<i32: 0>} : vector<10x128xi32>
    %c8_i32 = arith.constant 8 : i32
    %18 = arith.muli %arg1, %c8_i32 : i32
    %c1_i32 = arith.constant 1 : i32
    %19 = arith.subi %18, %c1_i32 : i32
    %20 = vector.broadcast %19 : i32 to vector<10x128xi32>
    %21 = arith.addi %17, %20 : vector<10x128xi32>
    %c0_i32_9 = arith.constant 0 : i32
    %22 = vector.broadcast %c0_i32_9 : i32 to vector<10x128xi32>
    %23 = arith.cmpi sge, %21, %22 : vector<10x128xi32>
    %c16_i32_10 = arith.constant 16 : i32
    %24 = vector.broadcast %c16_i32_10 : i32 to vector<10x128xi32>
    %25 = arith.cmpi slt, %21, %24 : vector<10x128xi32>
    %26 = arith.andi %23, %25 : vector<10x128xi1>
    %cst_11 = arith.constant 0.000000e+00 : f32
    %27 = vector.broadcast %cst_11 : f32 to vector<10x128xf32>
    %28 = arith.select %26, %16, %27 : vector<10x128xi1>, vector<10x128xf32>
    %29 = vector.extract_strided_slice %28 {offsets = [0, 0], sizes = [8, 128], strides = [1, 1]} : vector<10x128xf32> to vector<8x128xf32>
    %c0_12 = arith.constant 0 : index
    %c0_13 = arith.constant 0 : index
    %c0_14 = arith.constant 0 : index
    %30 = vector.load %arg5[%c0_12, %c0_13, %c0_14] : memref<3x128x128xf32, #tpu.memory_space<vmem>>, vector<1x128x128xf32>
    %31 = vector.shape_cast %30 : vector<1x128x128xf32> to vector<128x128xf32>
    %cst_15 = arith.constant dense<0.000000e+00> : vector<8x128xf32>
    %32 = tpu.matmul %29, %31, %cst_15 {dimension_numbers = #tpu.dot_dimension_numbers<[1], [0], [0], [1], [0, 0, 1, 1], [], []>} : vector<8x128xf32>, vector<128x128xf32>, vector<8x128xf32> -> vector<8x128xf32>
    %33 = vector.extract_strided_slice %28 {offsets = [1, 0], sizes = [8, 128], strides = [1, 1]} : vector<10x128xf32> to vector<8x128xf32>
    %c1_16 = arith.constant 1 : index
    %c0_17 = arith.constant 0 : index
    %c0_18 = arith.constant 0 : index
    %34 = vector.load %arg5[%c1_16, %c0_17, %c0_18] : memref<3x128x128xf32, #tpu.memory_space<vmem>>, vector<1x128x128xf32>
    %35 = vector.shape_cast %34 : vector<1x128x128xf32> to vector<128x128xf32>
    %cst_19 = arith.constant dense<0.000000e+00> : vector<8x128xf32>
    %36 = tpu.matmul %33, %35, %cst_19 {dimension_numbers = #tpu.dot_dimension_numbers<[1], [0], [0], [1], [0, 0, 1, 1], [], []>} : vector<8x128xf32>, vector<128x128xf32>, vector<8x128xf32> -> vector<8x128xf32>
    %37 = arith.addf %32, %36 : vector<8x128xf32>
    %38 = vector.extract_strided_slice %28 {offsets = [2, 0], sizes = [8, 128], strides = [1, 1]} : vector<10x128xf32> to vector<8x128xf32>
    %c2_20 = arith.constant 2 : index
    %c0_21 = arith.constant 0 : index
    %c0_22 = arith.constant 0 : index
    %39 = vector.load %arg5[%c2_20, %c0_21, %c0_22] : memref<3x128x128xf32, #tpu.memory_space<vmem>>, vector<1x128x128xf32>
    %40 = vector.shape_cast %39 : vector<1x128x128xf32> to vector<128x128xf32>
    %cst_23 = arith.constant dense<0.000000e+00> : vector<8x128xf32>
    %41 = tpu.matmul %38, %40, %cst_23 {dimension_numbers = #tpu.dot_dimension_numbers<[1], [0], [0], [1], [0, 0, 1, 1], [], []>} : vector<8x128xf32>, vector<128x128xf32>, vector<8x128xf32> -> vector<8x128xf32>
    %42 = arith.addf %37, %41 : vector<8x128xf32>
    %c3 = arith.constant 3 : index
    %c0_24 = arith.constant 0 : index
    %43 = tpu.strided_load %arg9[%c3, %c0_24] {strides = array<i32: 2, 1>} : memref<21x128xf32, #tpu.memory_space<vmem>>, vector<8x128xf32>
    %c0_25 = arith.constant 0 : index
    %c0_26 = arith.constant 0 : index
    %44 = vector.load %arg6[%c0_25, %c0_26] : memref<128x128xf32, #tpu.memory_space<vmem>>, vector<128x128xf32>
    %cst_27 = arith.constant dense<0.000000e+00> : vector<8x128xf32>
    %45 = tpu.matmul %43, %44, %cst_27 {dimension_numbers = #tpu.dot_dimension_numbers<[1], [0], [0], [1], [0, 0, 1, 1], [], []>} : vector<8x128xf32>, vector<128x128xf32>, vector<8x128xf32> -> vector<8x128xf32>
    %46 = arith.addf %42, %45 : vector<8x128xf32>
    %c0_28 = arith.constant 0 : index
    %c0_29 = arith.constant 0 : index
    %47 = vector.load %arg7[%c0_28, %c0_29] : memref<1x128xf32, #tpu.memory_space<vmem>>, vector<1x128xf32>
    %48 = vector.broadcast %47 : vector<1x128xf32> to vector<8x128xf32>
    %49 = arith.addf %46, %48 : vector<8x128xf32>
    %cst_30 = arith.constant 0.000000e+00 : f32
    %50 = vector.broadcast %cst_30 : f32 to vector<8x128xf32>
    %51 = arith.maximumf %49, %50 : vector<8x128xf32>
    %c0_31 = arith.constant 0 : index
    %c0_32 = arith.constant 0 : index
    %c0_33 = arith.constant 0 : index
    %52 = vector.load %arg8[%c0_31, %c0_32, %c0_33] : memref<1x8x128xf32, #tpu.memory_space<vmem>>, vector<1x8x128xf32>
    %53 = vector.shape_cast %52 : vector<1x8x128xf32> to vector<8x128xf32>
    %54 = vector.shape_cast %51 : vector<8x128xf32> to vector<1x8x128xf32>
    tpu.vector_store %arg8[%c0_31, %c0_32, %c0_33], %54 {strides = array<i32>} : memref<1x8x128xf32, #tpu.memory_space<vmem>>, vector<1x8x128xf32>,
    return
  }
  func.func @transform_1(%arg0: i32, %arg1: i32) -> (i32, i32) {
    %c0_i32 = arith.constant 0 : i32
    %c0_i32_0 = arith.constant 0 : i32
    %c0_i32_1 = arith.constant 0 : i32
    return %c0_i32, %c0_i32_0 : i32, i32
  }
  func.func @transform_2(%arg0: i32, %arg1: i32) -> (i32, i32) {
    %c0_i32 = arith.constant 0 : i32
    %c0_i32_0 = arith.constant 0 : i32
    %c0_i32_1 = arith.constant 0 : i32
    return %c0_i32, %c0_i32_0 : i32, i32
  }
  func.func @transform_3(%arg0: i32, %arg1: i32) -> (i32, i32, i32) {
    %c0_i32 = arith.constant 0 : i32
    %c0_i32_0 = arith.constant 0 : i32
    %c0_i32_1 = arith.constant 0 : i32
    %c0_i32_2 = arith.constant 0 : i32
    return %c0_i32, %c0_i32_0, %c0_i32_1 : i32, i32, i32
  }
  func.func @transform_4(%arg0: i32, %arg1: i32) -> (i32, i32) {
    %c0_i32 = arith.constant 0 : i32
    %c0_i32_0 = arith.constant 0 : i32
    %c0_i32_1 = arith.constant 0 : i32
    return %c0_i32, %c0_i32_0 : i32, i32
  }
  func.func @transform_5(%arg0: i32, %arg1: i32) -> (i32, i32) {
    %c0_i32 = arith.constant 0 : i32
    %c0_i32_0 = arith.constant 0 : i32
    %c0_i32_1 = arith.constant 0 : i32
    return %c0_i32, %c0_i32_0 : i32, i32
  }
  func.func @transform_6(%arg0: i32, %arg1: i32) -> (i32, i32, i32) {
    %c0_i32 = arith.constant 0 : i32
    %c0_i32_0 = arith.constant 0 : i32
    return %arg0, %arg1, %c0_i32 : i32, i32, i32
  }
}

</mosaic_0001>

<llo_original>
// kernel: tpu_custom_call.1
$region0: #{tpu_custom_call.1}
  #allocation0 [shape = 'u32[]', space=smem, size = 0x4, offset = 0x4, fixed_abs, tag = 'smem constant byte address 0x4 - core index']
  #allocation1 [shape = 'u32[144,128]{1,0:T(1,128)}', space=vmem, size = 0x12000, scoped, tag = 'internal scratch']
  #allocation2 [shape = 'f32[21,128]{1,0:T(8,128)}', space=vmem, size = 0x3000, scoped, tag = 'scratch operand']
  #allocation3 [shape = 's32[1]{0}', space=sflag, size = 0x4, scoped, tag = 'scratch operand']
  #allocation10 [shape = 's32[]', space=sflag, size = 0x4, offset = 0, fixed_abs, tag = 'sflag constant byte address 0x0 - dummy sync flag']
  %s0 = inlined_call_operand.vmem [shape: f32[2,37,128], index: 0, kind: input, shape index: {}]
  %s1 = inlined_call_operand.hbm [shape: f32[384,128], index: 1, kind: input, shape index: {}]
  %s2 = inlined_call_operand.vmem [shape: f32[1,128], index: 2, kind: input, shape index: {}]
  %s3 = inlined_call_operand.hbm [shape: f32[3,128,128], index: 3, kind: input, shape index: {}]
  %s4 = inlined_call_operand.vmem [shape: f32[128,128], index: 4, kind: input, shape index: {}]
  %s5 = inlined_call_operand.vmem [shape: f32[1,128], index: 5, kind: input, shape index: {}]
  %s6 = inlined_call_operand.hbm [shape: f32[2,16,128], index: 6, kind: output, shape index: {}]
  %s7 = sld [smem:[#allocation0]]
  $region98: #{tpu_custom_call.1} parent=0
    _
  %s9 = ssub.s32 1, %s7
  %s10 = scalar_select 0, %s9, %s7
  $region1: #{tpu_custom_call.1} parent=0
    #allocation4 [shape = 'u8[196608]{0}', space=vmem, size = 0x30000, scoped, tag = 'input window, operand 1, single buffered']
    #allocation5 [shape = 's32[2]{0}', space=sflag, size = 0x8, scoped, tag = 'scoped memory for tpu_custom_call.1']
    #allocation6 [shape = 's32[2]{0}', space=sflag, size = 0x8, scoped, tag = 'scoped memory for tpu_custom_call.1']
    #allocation7 [shape = 'u8[196608]{0}', space=vmem, size = 0x30000, scoped, tag = 'input window, operand 3, single buffered']
    #allocation8 [shape = 's32[1]{0}', space=sflag, size = 0x4, scoped, tag = 'scoped memory for tpu_custom_call.1']
    #allocation9 [shape = 'u8[8192]{0}', space=vmem, size = 0x2000, scoped, tag = 'output window, operand 0']
    %11 = vsyncpa [#allocation5], 0
    %12 = vsyncpa [#allocation8], 0
    %13 = vsyncpa [#allocation6], 0
    %s14 = scalar_lea.sflag [#allocation6], 1
    %15 = vsyncpa %s14, 0
    loop: start=0, step=1, limit=6
    $region2: #{tpu_custom_call.1} parent=1 // loop_pre_header
      _
    $region3: #{tpu_custom_call.1} parent=1 // loop_header
      %s17 = sphi 0, %s21
      %p18 = scmp.ge.s32.totalorder %s17, 6
      %s24 = sphi 0, %s36
      %s25 = sphi 0, %s32
      %s26 = sphi 0, %s24
      %s27 = sphi 0, %s25
      %s28 = sphi 0, %s26
      %s29 = sphi 0, %s27
      %s37 = sphi 0, %s37
      %s39 = sphi 0, %s37
      %s40 = sphi 0, %s39
      %s54 = sphi 0, %s40
      %s58 = sphi 0, %s58
      %s60 = sphi 0, %s58
      %s61 = sphi 0, %s60
      %s75 = sphi 0, %s61
      %s79 = sphi 0, %s79
      %s81 = sphi 0, %s79
      %s82 = sphi 0, %s81
      %s96 = sphi 0, %s82
      %s100 = sphi 0, %s100
      %s102 = sphi 0, %s100
      %s103 = sphi 0, %s102
      %s117 = sphi 0, %s103
      %s121 = sphi 0, %s121
      %s123 = sphi 0, %s121
      %s124 = sphi 0, %s123
      %s138 = sphi 0, %s124
      %s146 = sphi 0, %s148
      %s149 = sphi 0, %s146
      %s150 = sphi 0, %s149
      %s166 = sphi 0, %s150
    $region4: #{tpu_custom_call.1} parent=1 // loop_header_branch
      %20 = sbr.rel (%p18) target = $region8
    $region5: #{tpu_custom_call.1} parent=1 // loop_body
      %s22 = ssub.s32 %s17, 1
      %s23 = ssub.s32 %s17, 2
      %s30 = sadd.s32 1, %s25
      %p31 = scmp.ge.s32.totalorder %s30, 2
      %s32 = scalar_select %p31, 0, %s30
      %s33 = sadd.s32 1, %s24
      %s34 = scalar_select %p31, %s33, %s24
      %p35 = scmp.ge.s32.totalorder %s34, 2
      %s36 = scalar_select %p35, 0, %s34
      %s38 = sadd.s32 %s37, 1
      %p41 = scmp.eq.s32.totalorder %s17, 3
      %p42 = scmp.ne.s32.totalorder %s37, %s39
      %p43 = scmp.eq.s32.totalorder %s17, 0
      %p44 = por %p42, %p43
      %p45 = scmp.ne.s32.totalorder %s37, %s39
      %p46 = scmp.eq.s32.totalorder %s22, 3
      %p47 = por %p45, %p46
      %p48 = scmp.ne.s32.totalorder %s39, %s40
      %p49 = scmp.eq.s32.totalorder %s22, 0
      %p50 = por %p48, %p49
      %p51 = scmp.ne.s32.totalorder %s39, %s40
      %p52 = scmp.eq.s32.totalorder %s23, 3
      %p53 = por %p51, %p52
      %p55 = scmp.ne.s32.totalorder %s40, %s54
      %p56 = scmp.eq.s32.totalorder %s23, 0
      %p57 = por %p55, %p56
      %s59 = sadd.s32 %s58, 1
      %p62 = scmp.eq.s32.totalorder %s17, 3
      %p63 = scmp.ne.s32.totalorder %s58, %s60
      %p64 = scmp.eq.s32.totalorder %s17, 0
      %p65 = por %p63, %p64
      %p66 = scmp.ne.s32.totalorder %s58, %s60
      %p67 = scmp.eq.s32.totalorder %s22, 3
      %p68 = por %p66, %p67
      %p69 = scmp.ne.s32.totalorder %s60, %s61
      %p70 = scmp.eq.s32.totalorder %s22, 0
      %p71 = por %p69, %p70
      %p72 = scmp.ne.s32.totalorder %s60, %s61
      %p73 = scmp.eq.s32.totalorder %s23, 3
      %p74 = por %p72, %p73
      %p76 = scmp.ne.s32.totalorder %s61, %s75
      %p77 = scmp.eq.s32.totalorder %s23, 0
      %p78 = por %p76, %p77
      %s80 = sadd.s32 %s79, 1
      %p83 = scmp.eq.s32.totalorder %s17, 3
      %p84 = scmp.ne.s32.totalorder %s79, %s81
      %p85 = scmp.eq.s32.totalorder %s17, 0
      %p86 = por %p84, %p85
      %p87 = scmp.ne.s32.totalorder %s79, %s81
      %p88 = scmp.eq.s32.totalorder %s22, 3
      %p89 = por %p87, %p88
      %p90 = scmp.ne.s32.totalorder %s81, %s82
      %p91 = scmp.eq.s32.totalorder %s22, 0
      %p92 = por %p90, %p91
      %p93 = scmp.ne.s32.totalorder %s81, %s82
      %p94 = scmp.eq.s32.totalorder %s23, 3
      %p95 = por %p93, %p94
      %p97 = scmp.ne.s32.totalorder %s82, %s96
      %p98 = scmp.eq.s32.totalorder %s23, 0
      %p99 = por %p97, %p98
      %s101 = sadd.s32 %s100, 1
      %p104 = scmp.eq.s32.totalorder %s17, 3
      %p105 = scmp.ne.s32.totalorder %s100, %s102
      %p106 = scmp.eq.s32.totalorder %s17, 0
      %p107 = por %p105, %p106
      %p108 = scmp.ne.s32.totalorder %s100, %s102
      %p109 = scmp.eq.s32.totalorder %s22, 3
      %p110 = por %p108, %p109
      %p111 = scmp.ne.s32.totalorder %s102, %s103
      %p112 = scmp.eq.s32.totalorder %s22, 0
      %p113 = por %p111, %p112
      %p114 = scmp.ne.s32.totalorder %s102, %s103
      %p115 = scmp.eq.s32.totalorder %s23, 3
      %p116 = por %p114, %p115
      %p118 = scmp.ne.s32.totalorder %s103, %s117
      %p119 = scmp.eq.s32.totalorder %s23, 0
      %p120 = por %p118, %p119
      %s122 = sadd.s32 %s121, 1
      %p125 = scmp.eq.s32.totalorder %s17, 3
      %p126 = scmp.ne.s32.totalorder %s121, %s123
      %p127 = scmp.eq.s32.totalorder %s17, 0
      %p128 = por %p126, %p127
      %p129 = scmp.ne.s32.totalorder %s121, %s123
      %p130 = scmp.eq.s32.totalorder %s22, 3
      %p131 = por %p129, %p130
      %p132 = scmp.ne.s32.totalorder %s123, %s124
      %p133 = scmp.eq.s32.totalorder %s22, 0
      %p134 = por %p132, %p133
      %p135 = scmp.ne.s32.totalorder %s123, %s124
      %p136 = scmp.eq.s32.totalorder %s23, 3
      %p137 = por %p135, %p136
      %p139 = scmp.ne.s32.totalorder %s124, %s138
      %p140 = scmp.eq.s32.totalorder %s23, 0
      %p141 = por %p139, %p140
      %s142 = ssub.s32 %s24, %s36
      %s143 = ssub.s32 %s25, %s32
      %s144 = sor.u32 %s142, %s143
      %p145 = scmp.eq.s32.totalorder %s144, 0
      %s147 = sadd.s32 %s146, 1
      %s148 = scalar_select %p145, %s146, %s147
      %p151 = pneg %p145
      %p152 = scmp.eq.s32.totalorder %s17, 3
      %p153 = por %p151, %p152
      %p154 = scmp.ne.s32.totalorder %s146, %s149
      %p155 = scmp.eq.s32.totalorder %s17, 0
      %p156 = por %p154, %p155
      %p157 = scmp.ne.s32.totalorder %s146, %s149
      %p158 = scmp.eq.s32.totalorder %s22, 3
      %p159 = por %p157, %p158
      %p160 = scmp.ne.s32.totalorder %s149, %s150
      %p161 = scmp.eq.s32.totalorder %s22, 0
      %p162 = por %p160, %p161
      %p163 = scmp.ne.s32.totalorder %s149, %s150
      %p164 = scmp.eq.s32.totalorder %s23, 3
      %p165 = por %p163, %p164
      %p167 = scmp.ne.s32.totalorder %s150, %s166
      %p168 = scmp.eq.s32.totalorder %s23, 0
      %p169 = por %p167, %p168
      %p170 = scmp.le.s32.totalorder 1, %s17
      %p171 = scmp.lt.s32.totalorder %s17, 5
      %p172 = pnand %p170, %p171
      %p173 = pneg %p172
      // Predicated region
      $region9: #{tpu_custom_call.1} parent=5 // pred_check
        _
      $region10: #{tpu_custom_call.1} parent=5 // pred_check_branch
        %175 = sbr.rel (%p172) target = $region12
      $region11: #{tpu_custom_call.1} parent=5 // pred_region
        %s176 = ssub.s32 %s17, 1
        // Predicated region
        $region13: #{tpu_custom_call.1} parent=11 // pred_check
          %p177 = pneg %p50
        $region14: #{tpu_custom_call.1} parent=11 // pred_check_branch
          %179 = sbr.rel (%p177) target = $region16
        $region15: #{tpu_custom_call.1} parent=11 // pred_region
          %s181 = ssub.s32 6144, 6144
          %182 = vsyncadd [#allocation5], %s181
          %s183 = sshll.u32 [#allocation4], 4
          %s184 = int_to_ptr.vmem [resolvable:$true] %s183
          %189 = dma.hbm_to_vmem [thread:$0]  %s1, 6144, %s184, [#allocation5], 128, 128, 8
        $region16: #{tpu_custom_call.1} parent=11 // pred_fallthru
          _
        // Predicated region
        $region17: #{tpu_custom_call.1} parent=11 // pred_check
          %p190 = pneg %p71
        $region18: #{tpu_custom_call.1} parent=11 // pred_check_branch
          %192 = sbr.rel (%p190) target = $region20
        $region19: #{tpu_custom_call.1} parent=11 // pred_region
          _
        $region20: #{tpu_custom_call.1} parent=11 // pred_fallthru
          _
        // Predicated region
        $region21: #{tpu_custom_call.1} parent=11 // pred_check
          %p193 = pneg %p92
        $region22: #{tpu_custom_call.1} parent=11 // pred_check_branch
          %195 = sbr.rel (%p193) target = $region24
        $region23: #{tpu_custom_call.1} parent=11 // pred_region
          %s197 = ssub.s32 6144, 6144
          %198 = vsyncadd [#allocation8], %s197
          %s199 = sshll.u32 [#allocation7], 4
          %s200 = int_to_ptr.vmem [resolvable:$true] %s199
          %205 = dma.hbm_to_vmem [thread:$0]  %s3, 6144, %s200, [#allocation8], 128, 128, 8
        $region24: #{tpu_custom_call.1} parent=11 // pred_fallthru
          _
        // Predicated region
        $region25: #{tpu_custom_call.1} parent=11 // pred_check
          %p206 = pneg %p113
        $region26: #{tpu_custom_call.1} parent=11 // pred_check_branch
          %208 = sbr.rel (%p206) target = $region28
        $region27: #{tpu_custom_call.1} parent=11 // pred_region
          _
        $region28: #{tpu_custom_call.1} parent=11 // pred_fallthru
          _
        // Predicated region
        $region29: #{tpu_custom_call.1} parent=11 // pred_check
          %p209 = pneg %p134
        $region30: #{tpu_custom_call.1} parent=11 // pred_check_branch
          %211 = sbr.rel (%p209) target = $region32
        $region31: #{tpu_custom_call.1} parent=11 // pred_region
          _
        $region32: #{tpu_custom_call.1} parent=11 // pred_fallthru
          _
      $region12: #{tpu_custom_call.1} parent=5 // pred_fallthru
        _
      %p212 = scmp.lt.s32.totalorder %s17, 4
      // Predicated region
      $region33: #{tpu_custom_call.1} parent=5 // pred_check
        %p213 = pneg %p212
      $region34: #{tpu_custom_call.1} parent=5 // pred_check_branch
        %215 = sbr.rel (%p213) target = $region36
      $region35: #{tpu_custom_call.1} parent=5 // pred_region
        _
      $region36: #{tpu_custom_call.1} parent=5 // pred_fallthru
        _
      %p216 = scmp.le.s32.totalorder 1, %s17
      %p217 = scmp.lt.s32.totalorder %s17, 5
      %p218 = pnand %p216, %p217
      %p219 = pneg %p218
      // Predicated region
      $region37: #{tpu_custom_call.1} parent=5 // pred_check
        _
      $region38: #{tpu_custom_call.1} parent=5 // pred_check_branch
        %221 = sbr.rel (%p218) target = $region40
      $region39: #{tpu_custom_call.1} parent=5 // pred_region
        %s222 = ssub.s32 %s17, 1
        // Predicated region
        $region41: #{tpu_custom_call.1} parent=39 // pred_check
          %p223 = pneg %p50
        $region42: #{tpu_custom_call.1} parent=39 // pred_check_branch
          %225 = sbr.rel (%p223) target = $region44
        $region43: #{tpu_custom_call.1} parent=39 // pred_region
          %226 = dma.done [#allocation5], 6144
        $region44: #{tpu_custom_call.1} parent=39 // pred_fallthru
          _
        // Predicated region
        $region45: #{tpu_custom_call.1} parent=39 // pred_check
          %p227 = pneg %p92
        $region46: #{tpu_custom_call.1} parent=39 // pred_check_branch
          %229 = sbr.rel (%p227) target = $region48
        $region47: #{tpu_custom_call.1} parent=39 // pred_region
          %230 = dma.done [#allocation8], 6144
        $region48: #{tpu_custom_call.1} parent=39 // pred_fallthru
          _
        %p231 = pneg %p50
        %p232 = pneg %p47
        %p233 = pneg %p71
        %p234 = pneg %p68
        %p235 = pneg %p92
        %p236 = pneg %p89
        %p237 = pneg %p113
        %p238 = pneg %p110
        %p239 = pneg %p134
        %p240 = pneg %p131
        %p241 = pneg %p162
        %p242 = pneg %p159
        %s243 = sand.u32 %s149, 1
        %s244 = scalar_lea.sflag [#allocation6], %s243
        %s245 = sand.u32 %s149, 1
        %s246 = smul.addr %s245, 8
        %s247 = scalar_lea.vmem [#allocation9], %s246
        %s248 = smul.u32 %s27, 16
        %s249 = smul.u32 %s26, 40
        %s250 = sadd.s32 %s248, %s249
        %s251 = scalar_lea.vmem %s0, %s250
        %p253 = scmp.lt.u32.totalorder 21, 8
        %p254 = pneg %p253
        // Predicated region
        $region49: #{tpu_custom_call.1} parent=39 // pred_check
          _
        $region50: #{tpu_custom_call.1} parent=39 // pred_check_branch
          %256 = sbr.rel (%p253) target = $region52
        $region51: #{tpu_custom_call.1} parent=39 // pred_region
          %s271 = sand.u32 21, 7
          %p272 = scmp.eq.s32.totalorder %s271, 0
          %p273 = pneg %p272
          // Predicated region
          $region64: #{tpu_custom_call.1} parent=51 // pred_check
            _
          $region65: #{tpu_custom_call.1} parent=51 // pred_check_branch
            %275 = sbr.rel (%p272) target = $region67
          $region66: #{tpu_custom_call.1} parent=51 // pred_region
            %s276 = sand.u32 21, 7
            %s277 = ssub.s32 21, %s276
            %s278 = scalar_lea.vmem %s251, %s277
            %s279 = ssub.s32 21, %s276
            %s280 = scalar_lea.vmem [#allocation2], %s279
            loop: start=0, step=1, limit=1
            $region68: #{tpu_custom_call.1} parent=66 // loop_pre_header
              _
            $region69: #{tpu_custom_call.1} parent=66 // loop_header
              %s282 = sphi 0, %s286
              %p283 = scmp.ge.s32.totalorder %s282, 1
              %s287 = sphi %s251, %s251
              %s288 = sphi [#allocation2], [#allocation2]
            $region70: #{tpu_custom_call.1} parent=66 // loop_header_branch
              %285 = sbr.rel (%p283) target = $region74
            $region71: #{tpu_custom_call.1} parent=66 // loop_body
              %v289 = vld [vmem:[%s287] sm:$0xff]
              %290 = vst [vmem:[%s288] sm:$0xff] %v289
              %v291 = vld [vmem:[%s287 + $0x8] sm:$0xff]
              %292 = vst [vmem:[%s288 + $0x8] sm:$0xff] %v291
            $region72: #{tpu_custom_call.1} parent=66 // loop_footer
              %s286 = sadd.s32 1, %s282
            $region73: #{tpu_custom_call.1} parent=66 // loop_footer_branch
              %281 = sbr.rel target = $region69
            $region74: #{tpu_custom_call.1} parent=66 // loop_exit
              _
            %s293 = sshllo.u32 0, %s276
            loop: start=0, step=1, limit=1
            $region75: #{tpu_custom_call.1} parent=66 // loop_pre_header
              _
            $region76: #{tpu_custom_call.1} parent=66 // loop_header
              %s295 = sphi 0, %s299
              %p296 = scmp.ge.s32.totalorder %s295, 1
              %s300 = sphi %s278, %s278
              %s301 = sphi %s280, %s280
            $region77: #{tpu_custom_call.1} parent=66 // loop_header_branch
              %298 = sbr.rel (%p296) target = $region81
            $region78: #{tpu_custom_call.1} parent=66 // loop_body
              %v302 = vld [vmem:[%s300] sm:%s293]
              %303 = vst [vmem:[%s301] sm:%s293] %v302
            $region79: #{tpu_custom_call.1} parent=66 // loop_footer
              %s299 = sadd.s32 1, %s295
            $region80: #{tpu_custom_call.1} parent=66 // loop_footer_branch
              %294 = sbr.rel target = $region76
            $region81: #{tpu_custom_call.1} parent=66 // loop_exit
              _
          $region67: #{tpu_custom_call.1} parent=51 // pred_fallthru
            _
        $region52: #{tpu_custom_call.1} parent=39 // pred_fallthru
          _
        // Predicated region
        $region53: #{tpu_custom_call.1} parent=39 // pred_check
          %p257 = pneg %p253
        $region54: #{tpu_custom_call.1} parent=39 // pred_check_branch
          %259 = sbr.rel (%p257) target = $region56
        $region55: #{tpu_custom_call.1} parent=39 // pred_region
          %s260 = sshllo.u32 0, 21
          loop: start=0, step=1, limit=1
          $region57: #{tpu_custom_call.1} parent=55 // loop_pre_header
            _
          $region58: #{tpu_custom_call.1} parent=55 // loop_header
            %s262 = sphi 0, %s266
            %p263 = scmp.ge.s32.totalorder %s262, 1
            %s267 = sphi %s251, %s251
            %s268 = sphi [#allocation2], [#allocation2]
          $region59: #{tpu_custom_call.1} parent=55 // loop_header_branch
            %265 = sbr.rel (%p263) target = $region63
          $region60: #{tpu_custom_call.1} parent=55 // loop_body
            %v269 = vld [vmem:[%s267] sm:%s260]
            %270 = vst [vmem:[%s268] sm:%s260] %v269
          $region61: #{tpu_custom_call.1} parent=55 // loop_footer
            %s266 = sadd.s32 1, %s262
          $region62: #{tpu_custom_call.1} parent=55 // loop_footer_branch
            %261 = sbr.rel target = $region58
          $region63: #{tpu_custom_call.1} parent=55 // loop_exit
            _
        $region56: #{tpu_custom_call.1} parent=39 // pred_fallthru
          _
        // Predicated region
        $region82: #{tpu_custom_call.1} parent=39 // pred_check
          _
        $region83: #{tpu_custom_call.1} parent=39 // pred_check_branch
          %306 = sbr.rel (0) target = $region85
        $region84: #{tpu_custom_call.1} parent=39 // pred_region
          %307 = vsyncadd [#allocation3], 336
        $region85: #{tpu_custom_call.1} parent=39 // pred_fallthru
          _
        %s308 = smul.u32 21, 1
        %s309 = sshll.u32 %s308, 4
        %310 = dma.done [#allocation3], %s309
        %v311 = vld [vmem:[#allocation2] ss:$2 sm:$0xff]
        %s312 = scalar_lea.vmem [#allocation2], 16
        %v313 = vld [vmem:[%s312] ss:$2 sm:$0x3]
        %s314 = scalar_lea.vmem [#allocation2], 1
        %v315 = vld [vmem:[%s314] ss:$2 sm:$0xff]
        %s316 = scalar_lea.vmem [#allocation2], 17
        %v317 = vld [vmem:[%s316] ss:$2 sm:$0x3]
        %s318 = scalar_lea.vmem [#allocation2], 2
        %v319 = vld [vmem:[%s318] ss:$2 sm:$0xff]
        %s320 = scalar_lea.vmem [#allocation2], 18
        %v321 = vld [vmem:[%s320] ss:$2 sm:$0x3]
        %v322 = vld [vmem:[#allocation4] sm:$0xff]
        %v323 = vld [vmem:[#allocation4 + $0x8] sm:$0xff]
        %v324 = vld [vmem:[#allocation4 + $0x10] sm:$0xff]
        %v325 = vld [vmem:[#allocation4 + $0x18] sm:$0xff]
        %v326 = vld [vmem:[#allocation4 + $0x20] sm:$0xff]
        %v327 = vld [vmem:[#allocation4 + $0x28] sm:$0xff]
        %v328 = vld [vmem:[#allocation4 + $0x30] sm:$0xff]
        %v329 = vld [vmem:[#allocation4 + $0x38] sm:$0xff]
        %v330 = vld [vmem:[#allocation4 + $0x40] sm:$0xff]
        %v331 = vld [vmem:[#allocation4 + $0x48] sm:$0xff]
        %v332 = vld [vmem:[#allocation4 + $0x50] sm:$0xff]
        %v333 = vld [vmem:[#allocation4 + $0x58] sm:$0xff]
        %v334 = vld [vmem:[#allocation4 + $0x60] sm:$0xff]
        %v335 = vld [vmem:[#allocation4 + $0x68] sm:$0xff]
        %v336 = vld [vmem:[#allocation4 + $0x70] sm:$0xff]
        %v337 = vld [vmem:[#allocation4 + $0x78] sm:$0xff]
        %v338 = vld [vmem:[#allocation4 + $0x80] sm:$0xff]
        %v339 = vld [vmem:[#allocation4 + $0x88] sm:$0xff]
        %v340 = vld [vmem:[#allocation4 + $0x90] sm:$0xff]
        %v341 = vld [vmem:[#allocation4 + $0x98] sm:$0xff]
        %v342 = vld [vmem:[#allocation4 + $0xa0] sm:$0xff]
        %v343 = vld [vmem:[#allocation4 + $0xa8] sm:$0xff]
        %v344 = vld [vmem:[#allocation4 + $0xb0] sm:$0xff]
        %v345 = vld [vmem:[#allocation4 + $0xb8] sm:$0xff]
        %v346 = vld [vmem:[#allocation4 + $0xc0] sm:$0xff]
        %v347 = vld [vmem:[#allocation4 + $0xc8] sm:$0xff]
        %v348 = vld [vmem:[#allocation4 + $0xd0] sm:$0xff]
        %v349 = vld [vmem:[#allocation4 + $0xd8] sm:$0xff]
        %v350 = vld [vmem:[#allocation4 + $0xe0] sm:$0xff]
        %v351 = vld [vmem:[#allocation4 + $0xe8] sm:$0xff]
        %v352 = vld [vmem:[#allocation4 + $0xf0] sm:$0xff]
        %v353 = vld [vmem:[#allocation4 + $0xf8] sm:$0xff]
        %v354 = vld [vmem:[#allocation4 + $0x100] sm:$0xff]
        %v355 = vld [vmem:[#allocation4 + $0x108] sm:$0xff]
        %v356 = vld [vmem:[#allocation4 + $0x110] sm:$0xff]
        %v357 = vld [vmem:[#allocation4 + $0x118] sm:$0xff]
        %v358 = vld [vmem:[#allocation4 + $0x120] sm:$0xff]
        %v359 = vld [vmem:[#allocation4 + $0x128] sm:$0xff]
        %v360 = vld [vmem:[#allocation4 + $0x130] sm:$0xff]
        %v361 = vld [vmem:[#allocation4 + $0x138] sm:$0xff]
        %v362 = vld [vmem:[#allocation4 + $0x140] sm:$0xff]
        %v363 = vld [vmem:[#allocation4 + $0x148] sm:$0xff]
        %v364 = vld [vmem:[#allocation4 + $0x150] sm:$0xff]
        %v365 = vld [vmem:[#allocation4 + $0x158] sm:$0xff]
        %v366 = vld [vmem:[#allocation4 + $0x160] sm:$0xff]
        %v367 = vld [vmem:[#allocation4 + $0x168] sm:$0xff]
        %v368 = vld [vmem:[#allocation4 + $0x170] sm:$0xff]
        %v369 = vld [vmem:[#allocation4 + $0x178] sm:$0xff]
        %v370 = vld [vmem:[%s2] sm:$0x1]
        %v372 = vlaneseq
        %v373 = vshrl.u32 %v372, 7
        %v374 = vsub.s32 0, %v373
        %v375 = vrot.slane %v370, %v374
        %377 = vmatprep.subr.mxu0 0.0
        %378 = vmatpush1.msra.mxu0 %v322
        %379 = vmatprep.subr.mxu0 0.0
        %380 = vmatpush1.msra.mxu0 %v323
        %381 = vmatprep.subr.mxu0 0.0
        %382 = vmatpush1.msra.mxu0 %v324
        %383 = vmatprep.subr.mxu0 0.0
        %384 = vmatpush1.msra.mxu0 %v325
        %385 = vmatprep.subr.mxu0 0.0
        %386 = vmatpush1.msra.mxu0 %v326
        %387 = vmatprep.subr.mxu0 0.0
        %388 = vmatpush1.msra.mxu0 %v327
        %389 = vmatprep.subr.mxu0 0.0
        %390 = vmatpush1.msra.mxu0 %v328
        %391 = vmatprep.subr.mxu0 0.0
        %392 = vmatpush1.msra.mxu0 %v329
        %393 = vmatprep.subr.mxu0 0.0
        %394 = vmatpush1.msra.mxu0 %v330
        %395 = vmatprep.subr.mxu0 0.0
        %396 = vmatpush1.msra.mxu0 %v331
        %397 = vmatprep.subr.mxu0 0.0
        %398 = vmatpush1.msra.mxu0 %v332
        %399 = vmatprep.subr.mxu0 0.0
        %400 = vmatpush1.msra.mxu0 %v333
        %401 = vmatprep.subr.mxu0 0.0
        %402 = vmatpush1.msra.mxu0 %v334
        %403 = vmatprep.subr.mxu0 0.0
        %404 = vmatpush1.msra.mxu0 %v335
        %405 = vmatprep.subr.mxu0 0.0
        %406 = vmatpush1.msra.mxu0 %v336
        %407 = vmatprep.subr.mxu0 0.0
        %408 = vmatpush1.msra.mxu0 %v337
        %409 = vmatprep.subr.mxu0 0.0
        %410 = vmatpush1.msra.mxu0 %v338
        %411 = vmatprep.subr.mxu0 0.0
        %412 = vmatpush1.msra.mxu0 %v339
        %413 = vmatprep.subr.mxu0 0.0
        %414 = vmatpush1.msra.mxu0 %v340
        %415 = vmatprep.subr.mxu0 0.0
        %416 = vmatpush1.msra.mxu0 %v341
        %417 = vmatprep.subr.mxu0 0.0
        %418 = vmatpush1.msra.mxu0 %v342
        %419 = vmatprep.subr.mxu0 0.0
        %420 = vmatpush1.msra.mxu0 %v343
        %421 = vmatprep.subr.mxu0 0.0
        %422 = vmatpush1.msra.mxu0 %v344
        %423 = vmatprep.subr.mxu0 0.0
        %424 = vmatpush1.msra.mxu0 %v345
        %425 = vmatprep.subr.mxu0 0.0
        %426 = vmatpush1.msra.mxu0 %v346
        %427 = vmatprep.subr.mxu0 0.0
        %428 = vmatpush1.msra.mxu0 %v347
        %429 = vmatprep.subr.mxu0 0.0
        %430 = vmatpush1.msra.mxu0 %v348
        %431 = vmatprep.subr.mxu0 0.0
        %432 = vmatpush1.msra.mxu0 %v349
        %433 = vmatprep.subr.mxu0 0.0
        %434 = vmatpush1.msra.mxu0 %v350
        %435 = vmatprep.subr.mxu0 0.0
        %436 = vmatpush1.msra.mxu0 %v351
        %437 = vmatprep.subr.mxu0 0.0
        %438 = vmatpush1.msra.mxu0 %v352
        %439 = vmatprep.subr.mxu0 0.0
        %440 = vmatpush1.msra.mxu0 %v353
        %441 = vmatprep.mubr.f32.mxu0 %v315
        %442 = vmatmul.mubr.f32.gmra.mrb[0].mxu0 %v311
        %v443 = vpop.f32.mrb[0].mxu0
        %v444 = vadd.f32 %v375, %v443
        %v445 = vpop.f32.mrb[0].mxu0
        %446 = vmatprep.mubr.f32.mxu0 %v317
        %447 = vmatmul.mubr.f32.gmra.mrb[0].mxu0 %v313
        %v448 = vpop.f32.mrb[0].mxu0
        %v449 = vadd.f32 %v375, %v448
        %v450 = vpop.f32.mrb[0].mxu0
        %451 = vdwg.mxu0
        %452 = vmatprep.subr.mxu0 0.0
        %453 = vmatpush1.msra.mxu0 %v354
        %454 = vmatprep.subr.mxu0 0.0
        %455 = vmatpush1.msra.mxu0 %v355
        %456 = vmatprep.subr.mxu0 0.0
        %457 = vmatpush1.msra.mxu0 %v356
        %458 = vmatprep.subr.mxu0 0.0
        %459 = vmatpush1.msra.mxu0 %v357
        %460 = vmatprep.subr.mxu0 0.0
        %461 = vmatpush1.msra.mxu0 %v358
        %462 = vmatprep.subr.mxu0 0.0
        %463 = vmatpush1.msra.mxu0 %v359
        %464 = vmatprep.subr.mxu0 0.0
        %465 = vmatpush1.msra.mxu0 %v360
        %466 = vmatprep.subr.mxu0 0.0
        %467 = vmatpush1.msra.mxu0 %v361
        %468 = vmatprep.subr.mxu0 0.0
        %469 = vmatpush1.msra.mxu0 %v362
        %470 = vmatprep.subr.mxu0 0.0
        %471 = vmatpush1.msra.mxu0 %v363
        %472 = vmatprep.subr.mxu0 0.0
        %473 = vmatpush1.msra.mxu0 %v364
        %474 = vmatprep.subr.mxu0 0.0
        %475 = vmatpush1.msra.mxu0 %v365
        %476 = vmatprep.subr.mxu0 0.0
        %477 = vmatpush1.msra.mxu0 %v366
        %478 = vmatprep.subr.mxu0 0.0
        %479 = vmatpush1.msra.mxu0 %v367
        %480 = vmatprep.subr.mxu0 0.0
        %481 = vmatpush1.msra.mxu0 %v368
        %482 = vmatprep.subr.mxu0 0.0
        %483 = vmatpush1.msra.mxu0 %v369
        %484 = vmatprep.subr.mxu0 0.0
        %485 = vmatpush1.msra.mxu0 0.0
        %486 = vmatprep.subr.mxu0 0.0
        %487 = vmatpush1.msra.mxu0 0.0
        %488 = vmatprep.subr.mxu0 0.0
        %489 = vmatpush1.msra.mxu0 0.0
        %490 = vmatprep.subr.mxu0 0.0
        %491 = vmatpush1.msra.mxu0 0.0
        %492 = vmatprep.subr.mxu0 0.0
        %493 = vmatpush1.msra.mxu0 0.0
        %494 = vmatprep.subr.mxu0 0.0
        %495 = vmatpush1.msra.mxu0 0.0
        %496 = vmatprep.subr.mxu0 0.0
        %497 = vmatpush1.msra.mxu0 0.0
        %498 = vmatprep.subr.mxu0 0.0
        %499 = vmatpush1.msra.mxu0 0.0
        %500 = vmatprep.subr.mxu0 0.0
        %501 = vmatpush1.msra.mxu0 0.0
        %502 = vmatprep.subr.mxu0 0.0
        %503 = vmatpush1.msra.mxu0 0.0
        %504 = vmatprep.subr.mxu0 0.0
        %505 = vmatpush1.msra.mxu0 0.0
        %506 = vmatprep.subr.mxu0 0.0
        %507 = vmatpush1.msra.mxu0 0.0
        %508 = vmatprep.subr.mxu0 0.0
        %509 = vmatpush1.msra.mxu0 0.0
        %510 = vmatprep.subr.mxu0 0.0
        %511 = vmatpush1.msra.mxu0 0.0
        %512 = vmatprep.subr.mxu0 0.0
        %513 = vmatpush1.msra.mxu0 0.0
        %514 = vmatprep.subr.mxu0 0.0
        %515 = vmatpush1.msra.mxu0 0.0
        %516 = vmatprep.mubr.f32.mxu0 0.0
        %517 = vmatmul.mubr.f32.gmra.mrb[0].mxu0 %v319
        %v518 = vpop.f32.mrb[0].mxu0
        %v519 = vadd.f32 %v444, %v518
        %v520 = vpop.f32.mrb[0].mxu0
        %521 = vmatprep.mubr.f32.mxu0 0.0
        %522 = vmatmul.mubr.f32.gmra.mrb[0].mxu0 %v321
        %v523 = vpop.f32.mrb[0].mxu0
        %v524 = vadd.f32 %v449, %v523
        %v525 = vpop.f32.mrb[0].mxu0
        %526 = vdwg.mxu0
        %v527 = vmax.f32 %v519, 0.0
        %v528 = vmax.f32 %v524, 0.0
        %v529 = vlaneseq
        %v530 = vshrl.u32 %v529, 7
        %v531 = vadd.s32 %v530, 8
        %s532 = smul.u32 %s27, 8
        %s533 = ssub.s32 %s532, 1
        %v534 = vstv %s533
        %v535 = vadd.s32 %v530, %v534
        %v536 = vadd.s32 %v531, %v534
        %vm537 = vcmp.ge.s32.totalorder %v535, 0
        %vm538 = vcmp.ge.s32.totalorder %v536, 0
        %vm539 = vcmp.lt.s32.totalorder %v535, 16
        %vm540 = vcmp.lt.s32.totalorder %v536, 16
        %vm541 = vmand %vm537, %vm539
        %vm542 = vmand %vm538, %vm540
        %v543 = vsel %vm541, %v527, 0.0
        %v544 = vsel %vm542, %v528, 0.0
        %v545 = vld [vmem:[#allocation7] sm:$0xff]
        %v546 = vld [vmem:[#allocation7 + $0x8] sm:$0xff]
        %v547 = vld [vmem:[#allocation7 + $0x10] sm:$0xff]
        %v548 = vld [vmem:[#allocation7 + $0x18] sm:$0xff]
        %v549 = vld [vmem:[#allocation7 + $0x20] sm:$0xff]
        %v550 = vld [vmem:[#allocation7 + $0x28] sm:$0xff]
        %v551 = vld [vmem:[#allocation7 + $0x30] sm:$0xff]
        %v552 = vld [vmem:[#allocation7 + $0x38] sm:$0xff]
        %v553 = vld [vmem:[#allocation7 + $0x40] sm:$0xff]
        %v554 = vld [vmem:[#allocation7 + $0x48] sm:$0xff]
        %v555 = vld [vmem:[#allocation7 + $0x50] sm:$0xff]
        %v556 = vld [vmem:[#allocation7 + $0x58] sm:$0xff]
        %v557 = vld [vmem:[#allocation7 + $0x60] sm:$0xff]
        %v558 = vld [vmem:[#allocation7 + $0x68] sm:$0xff]
        %v559 = vld [vmem:[#allocation7 + $0x70] sm:$0xff]
        %v560 = vld [vmem:[#allocation7 + $0x78] sm:$0xff]
        %s561 = scalar_lea.vmem [#allocation7], 128
        %v562 = vld [vmem:[%s561] sm:$0xff]
        %v563 = vld [vmem:[%s561 + $0x8] sm:$0xff]
        %v564 = vld [vmem:[%s561 + $0x10] sm:$0xff]
        %v565 = vld [vmem:[%s561 + $0x18] sm:$0xff]
        %v566 = vld [vmem:[%s561 + $0x20] sm:$0xff]
        %v567 = vld [vmem:[%s561 + $0x28] sm:$0xff]
        %v568 = vld [vmem:[%s561 + $0x30] sm:$0xff]
        %v569 = vld [vmem:[%s561 + $0x38] sm:$0xff]
        %v570 = vld [vmem:[%s561 + $0x40] sm:$0xff]
        %v571 = vld [vmem:[%s561 + $0x48] sm:$0xff]
        %v572 = vld [vmem:[%s561 + $0x50] sm:$0xff]
        %v573 = vld [vmem:[%s561 + $0x58] sm:$0xff]
        %v574 = vld [vmem:[%s561 + $0x60] sm:$0xff]
        %v575 = vld [vmem:[%s561 + $0x68] sm:$0xff]
        %v576 = vld [vmem:[%s561 + $0x70] sm:$0xff]
        %v577 = vld [vmem:[%s561 + $0x78] sm:$0xff]
        %vm580 = vcmask 1046528
        %v581 = vrot.slane %v543, 1
        %v582 = vrot.slane %v544, 1
        %v583 = vsel %vm580, %v581, %v582
        %585 = vmatprep.subr.mxu0 0.0
        %586 = vmatpush1.msra.mxu0 %v562
        %587 = vmatprep.subr.mxu0 0.0
        %588 = vmatpush1.msra.mxu0 %v563
        %589 = vmatprep.subr.mxu0 0.0
        %590 = vmatpush1.msra.mxu0 %v564
        %591 = vmatprep.subr.mxu0 0.0
        %592 = vmatpush1.msra.mxu0 %v565
        %593 = vmatprep.subr.mxu0 0.0
        %594 = vmatpush1.msra.mxu0 %v566
        %595 = vmatprep.subr.mxu0 0.0
        %596 = vmatpush1.msra.mxu0 %v567
        %597 = vmatprep.subr.mxu0 0.0
        %598 = vmatpush1.msra.mxu0 %v568
        %599 = vmatprep.subr.mxu0 0.0
        %600 = vmatpush1.msra.mxu0 %v569
        %601 = vmatprep.subr.mxu0 0.0
        %602 = vmatpush1.msra.mxu0 %v570
        %603 = vmatprep.subr.mxu0 0.0
        %604 = vmatpush1.msra.mxu0 %v571
        %605 = vmatprep.subr.mxu0 0.0
        %606 = vmatpush1.msra.mxu0 %v572
        %607 = vmatprep.subr.mxu0 0.0
        %608 = vmatpush1.msra.mxu0 %v573
        %609 = vmatprep.subr.mxu0 0.0
        %610 = vmatpush1.msra.mxu0 %v574
        %611 = vmatprep.subr.mxu0 0.0
        %612 = vmatpush1.msra.mxu0 %v575
        %613 = vmatprep.subr.mxu0 0.0
        %614 = vmatpush1.msra.mxu0 %v576
        %615 = vmatprep.subr.mxu0 0.0
        %616 = vmatpush1.msra.mxu0 %v577
        %617 = vmatprep.subr.mxu0 0.0
        %618 = vmatpush1.msra.mxu0 0.0
        %619 = vmatprep.subr.mxu0 0.0
        %620 = vmatpush1.msra.mxu0 0.0
        %621 = vmatprep.subr.mxu0 0.0
        %622 = vmatpush1.msra.mxu0 0.0
        %623 = vmatprep.subr.mxu0 0.0
        %624 = vmatpush1.msra.mxu0 0.0
        %625 = vmatprep.subr.mxu0 0.0
        %626 = vmatpush1.msra.mxu0 0.0
        %627 = vmatprep.subr.mxu0 0.0
        %628 = vmatpush1.msra.mxu0 0.0
        %629 = vmatprep.subr.mxu0 0.0
        %630 = vmatpush1.msra.mxu0 0.0
        %631 = vmatprep.subr.mxu0 0.0
        %632 = vmatpush1.msra.mxu0 0.0
        %633 = vmatprep.subr.mxu0 0.0
        %634 = vmatpush1.msra.mxu0 0.0
        %635 = vmatprep.subr.mxu0 0.0
        %636 = vmatpush1.msra.mxu0 0.0
        %637 = vmatprep.subr.mxu0 0.0
        %638 = vmatpush1.msra.mxu0 0.0
        %639 = vmatprep.subr.mxu0 0.0
        %640 = vmatpush1.msra.mxu0 0.0
        %641 = vmatprep.subr.mxu0 0.0
        %642 = vmatpush1.msra.mxu0 0.0
        %643 = vmatprep.subr.mxu0 0.0
        %644 = vmatpush1.msra.mxu0 0.0
        %645 = vmatprep.subr.mxu0 0.0
        %646 = vmatpush1.msra.mxu0 0.0
        %647 = vmatprep.subr.mxu0 0.0
        %648 = vmatpush1.msra.mxu0 0.0
        %649 = vmatprep.mubr.f32.mxu0 0.0
        %650 = vmatmul.mubr.f32.gmra.mrb[0].mxu0 %v583
        %v651 = vpop.f32.mrb[0].mxu0
        %v652 = vadd.f32 0.0, %v651
        %v653 = vpop.f32.mrb[0].mxu0
        %654 = vdwg.mxu0
        %655 = vmatprep.subr.mxu0 0.0
        %656 = vmatpush1.msra.mxu0 %v545
        %657 = vmatprep.subr.mxu0 0.0
        %658 = vmatpush1.msra.mxu0 %v546
        %659 = vmatprep.subr.mxu0 0.0
        %660 = vmatpush1.msra.mxu0 %v547
        %661 = vmatprep.subr.mxu0 0.0
        %662 = vmatpush1.msra.mxu0 %v548
        %663 = vmatprep.subr.mxu0 0.0
        %664 = vmatpush1.msra.mxu0 %v549
        %665 = vmatprep.subr.mxu0 0.0
        %666 = vmatpush1.msra.mxu0 %v550
        %667 = vmatprep.subr.mxu0 0.0
        %668 = vmatpush1.msra.mxu0 %v551
        %669 = vmatprep.subr.mxu0 0.0
        %670 = vmatpush1.msra.mxu0 %v552
        %671 = vmatprep.subr.mxu0 0.0
        %672 = vmatpush1.msra.mxu0 %v553
        %673 = vmatprep.subr.mxu0 0.0
        %674 = vmatpush1.msra.mxu0 %v554
        %675 = vmatprep.subr.mxu0 0.0
        %676 = vmatpush1.msra.mxu0 %v555
        %677 = vmatprep.subr.mxu0 0.0
        %678 = vmatpush1.msra.mxu0 %v556
        %679 = vmatprep.subr.mxu0 0.0
        %680 = vmatpush1.msra.mxu0 %v557
        %681 = vmatprep.subr.mxu0 0.0
        %682 = vmatpush1.msra.mxu0 %v558
        %683 = vmatprep.subr.mxu0 0.0
        %684 = vmatpush1.msra.mxu0 %v559
        %685 = vmatprep.subr.mxu0 0.0
        %686 = vmatpush1.msra.mxu0 %v560
        %687 = vmatprep.subr.mxu0 0.0
        %688 = vmatpush1.msra.mxu0 0.0
        %689 = vmatprep.subr.mxu0 0.0
        %690 = vmatpush1.msra.mxu0 0.0
        %691 = vmatprep.subr.mxu0 0.0
        %692 = vmatpush1.msra.mxu0 0.0
        %693 = vmatprep.subr.mxu0 0.0
        %694 = vmatpush1.msra.mxu0 0.0
        %695 = vmatprep.subr.mxu0 0.0
        %696 = vmatpush1.msra.mxu0 0.0
        %697 = vmatprep.subr.mxu0 0.0
        %698 = vmatpush1.msra.mxu0 0.0
        %699 = vmatprep.subr.mxu0 0.0
        %700 = vmatpush1.msra.mxu0 0.0
        %701 = vmatprep.subr.mxu0 0.0
        %702 = vmatpush1.msra.mxu0 0.0
        %703 = vmatprep.subr.mxu0 0.0
        %704 = vmatpush1.msra.mxu0 0.0
        %705 = vmatprep.subr.mxu0 0.0
        %706 = vmatpush1.msra.mxu0 0.0
        %707 = vmatprep.subr.mxu0 0.0
        %708 = vmatpush1.msra.mxu0 0.0
        %709 = vmatprep.subr.mxu0 0.0
        %710 = vmatpush1.msra.mxu0 0.0
        %711 = vmatprep.subr.mxu0 0.0
        %712 = vmatpush1.msra.mxu0 0.0
        %713 = vmatprep.subr.mxu0 0.0
        %714 = vmatpush1.msra.mxu0 0.0
        %715 = vmatprep.subr.mxu0 0.0
        %716 = vmatpush1.msra.mxu0 0.0
        %717 = vmatprep.subr.mxu0 0.0
        %718 = vmatpush1.msra.mxu0 0.0
        %719 = vmatprep.mubr.f32.mxu0 0.0
        %720 = vmatmul.mubr.f32.gmra.mrb[0].mxu0 %v543
        %v721 = vpop.f32.mrb[0].mxu0
        %v722 = vadd.f32 %v652, %v721
        %v723 = vpop.f32.mrb[0].mxu0
        %724 = vdwg.mxu0
        %s725 = scalar_lea.vmem [#allocation7], 256
        %v726 = vld [vmem:[%s725] sm:$0xff]
        %v727 = vld [vmem:[%s725 + $0x8] sm:$0xff]
        %v728 = vld [vmem:[%s725 + $0x10] sm:$0xff]
        %v729 = vld [vmem:[%s725 + $0x18] sm:$0xff]
        %v730 = vld [vmem:[%s725 + $0x20] sm:$0xff]
        %v731 = vld [vmem:[%s725 + $0x28] sm:$0xff]
        %v732 = vld [vmem:[%s725 + $0x30] sm:$0xff]
        %v733 = vld [vmem:[%s725 + $0x38] sm:$0xff]
        %v734 = vld [vmem:[%s725 + $0x40] sm:$0xff]
        %v735 = vld [vmem:[%s725 + $0x48] sm:$0xff]
        %v736 = vld [vmem:[%s725 + $0x50] sm:$0xff]
        %v737 = vld [vmem:[%s725 + $0x58] sm:$0xff]
        %v738 = vld [vmem:[%s725 + $0x60] sm:$0xff]
        %v739 = vld [vmem:[%s725 + $0x68] sm:$0xff]
        %v740 = vld [vmem:[%s725 + $0x70] sm:$0xff]
        %v741 = vld [vmem:[%s725 + $0x78] sm:$0xff]
        %vm742 = vcmask 1045504
        %v743 = vrot.slane %v543, 2
        %v744 = vrot.slane %v544, 2
        %v745 = vsel %vm742, %v743, %v744
        %747 = vmatprep.subr.mxu0 0.0
        %748 = vmatpush1.msra.mxu0 %v726
        %749 = vmatprep.subr.mxu0 0.0
        %750 = vmatpush1.msra.mxu0 %v727
        %751 = vmatprep.subr.mxu0 0.0
        %752 = vmatpush1.msra.mxu0 %v728
        %753 = vmatprep.subr.mxu0 0.0
        %754 = vmatpush1.msra.mxu0 %v729
        %755 = vmatprep.subr.mxu0 0.0
        %756 = vmatpush1.msra.mxu0 %v730
        %757 = vmatprep.subr.mxu0 0.0
        %758 = vmatpush1.msra.mxu0 %v731
        %759 = vmatprep.subr.mxu0 0.0
        %760 = vmatpush1.msra.mxu0 %v732
        %761 = vmatprep.subr.mxu0 0.0
        %762 = vmatpush1.msra.mxu0 %v733
        %763 = vmatprep.subr.mxu0 0.0
        %764 = vmatpush1.msra.mxu0 %v734
        %765 = vmatprep.subr.mxu0 0.0
        %766 = vmatpush1.msra.mxu0 %v735
        %767 = vmatprep.subr.mxu0 0.0
        %768 = vmatpush1.msra.mxu0 %v736
        %769 = vmatprep.subr.mxu0 0.0
        %770 = vmatpush1.msra.mxu0 %v737
        %771 = vmatprep.subr.mxu0 0.0
        %772 = vmatpush1.msra.mxu0 %v738
        %773 = vmatprep.subr.mxu0 0.0
        %774 = vmatpush1.msra.mxu0 %v739
        %775 = vmatprep.subr.mxu0 0.0
        %776 = vmatpush1.msra.mxu0 %v740
        %777 = vmatprep.subr.mxu0 0.0
        %778 = vmatpush1.msra.mxu0 %v741
        %779 = vmatprep.subr.mxu0 0.0
        %780 = vmatpush1.msra.mxu0 0.0
        %781 = vmatprep.subr.mxu0 0.0
        %782 = vmatpush1.msra.mxu0 0.0
        %783 = vmatprep.subr.mxu0 0.0
        %784 = vmatpush1.msra.mxu0 0.0
        %785 = vmatprep.subr.mxu0 0.0
        %786 = vmatpush1.msra.mxu0 0.0
        %787 = vmatprep.subr.mxu0 0.0
        %788 = vmatpush1.msra.mxu0 0.0
        %789 = vmatprep.subr.mxu0 0.0
        %790 = vmatpush1.msra.mxu0 0.0
        %791 = vmatprep.subr.mxu0 0.0
        %792 = vmatpush1.msra.mxu0 0.0
        %793 = vmatprep.subr.mxu0 0.0
        %794 = vmatpush1.msra.mxu0 0.0
        %795 = vmatprep.subr.mxu0 0.0
        %796 = vmatpush1.msra.mxu0 0.0
        %797 = vmatprep.subr.mxu0 0.0
        %798 = vmatpush1.msra.mxu0 0.0
        %799 = vmatprep.subr.mxu0 0.0
        %800 = vmatpush1.msra.mxu0 0.0
        %801 = vmatprep.subr.mxu0 0.0
        %802 = vmatpush1.msra.mxu0 0.0
        %803 = vmatprep.subr.mxu0 0.0
        %804 = vmatpush1.msra.mxu0 0.0
        %805 = vmatprep.subr.mxu0 0.0
        %806 = vmatpush1.msra.mxu0 0.0
        %807 = vmatprep.subr.mxu0 0.0
        %808 = vmatpush1.msra.mxu0 0.0
        %809 = vmatprep.subr.mxu0 0.0
        %810 = vmatpush1.msra.mxu0 0.0
        %811 = vmatprep.mubr.f32.mxu0 0.0
        %812 = vmatmul.mubr.f32.gmra.mrb[0].mxu0 %v745
        %v813 = vpop.f32.mrb[0].mxu0
        %v814 = vadd.f32 0.0, %v813
        %v815 = vpop.f32.mrb[0].mxu0
        %816 = vdwg.mxu0
        %v817 = vadd.f32 %v722, %v814
        %s818 = scalar_lea.vmem [#allocation2], 3
        %v819 = vld [vmem:[%s818] ss:$2 sm:$0xff]
        %v820 = vld [vmem:[%s4] sm:$0xff]
        %v821 = vld [vmem:[%s4 + $0x8] sm:$0xff]
        %v822 = vld [vmem:[%s4 + $0x10] sm:$0xff]
        %v823 = vld [vmem:[%s4 + $0x18] sm:$0xff]
        %v824 = vld [vmem:[%s4 + $0x20] sm:$0xff]
        %v825 = vld [vmem:[%s4 + $0x28] sm:$0xff]
        %v826 = vld [vmem:[%s4 + $0x30] sm:$0xff]
        %v827 = vld [vmem:[%s4 + $0x38] sm:$0xff]
        %v828 = vld [vmem:[%s4 + $0x40] sm:$0xff]
        %v829 = vld [vmem:[%s4 + $0x48] sm:$0xff]
        %v830 = vld [vmem:[%s4 + $0x50] sm:$0xff]
        %v831 = vld [vmem:[%s4 + $0x58] sm:$0xff]
        %v832 = vld [vmem:[%s4 + $0x60] sm:$0xff]
        %v833 = vld [vmem:[%s4 + $0x68] sm:$0xff]
        %v834 = vld [vmem:[%s4 + $0x70] sm:$0xff]
        %v835 = vld [vmem:[%s4 + $0x78] sm:$0xff]
        %836 = vmatprep.subr.mxu0 0.0
        %837 = vmatpush1.msra.mxu0 %v820
        %838 = vmatprep.subr.mxu0 0.0
        %839 = vmatpush1.msra.mxu0 %v821
        %840 = vmatprep.subr.mxu0 0.0
        %841 = vmatpush1.msra.mxu0 %v822
        %842 = vmatprep.subr.mxu0 0.0
        %843 = vmatpush1.msra.mxu0 %v823
        %844 = vmatprep.subr.mxu0 0.0
        %845 = vmatpush1.msra.mxu0 %v824
        %846 = vmatprep.subr.mxu0 0.0
        %847 = vmatpush1.msra.mxu0 %v825
        %848 = vmatprep.subr.mxu0 0.0
        %849 = vmatpush1.msra.mxu0 %v826
        %850 = vmatprep.subr.mxu0 0.0
        %851 = vmatpush1.msra.mxu0 %v827
        %852 = vmatprep.subr.mxu0 0.0
        %853 = vmatpush1.msra.mxu0 %v828
        %854 = vmatprep.subr.mxu0 0.0
        %855 = vmatpush1.msra.mxu0 %v829
        %856 = vmatprep.subr.mxu0 0.0
        %857 = vmatpush1.msra.mxu0 %v830
        %858 = vmatprep.subr.mxu0 0.0
        %859 = vmatpush1.msra.mxu0 %v831
        %860 = vmatprep.subr.mxu0 0.0
        %861 = vmatpush1.msra.mxu0 %v832
        %862 = vmatprep.subr.mxu0 0.0
        %863 = vmatpush1.msra.mxu0 %v833
        %864 = vmatprep.subr.mxu0 0.0
        %865 = vmatpush1.msra.mxu0 %v834
        %866 = vmatprep.subr.mxu0 0.0
        %867 = vmatpush1.msra.mxu0 %v835
        %868 = vmatprep.subr.mxu0 0.0
        %869 = vmatpush1.msra.mxu0 0.0
        %870 = vmatprep.subr.mxu0 0.0
        %871 = vmatpush1.msra.mxu0 0.0
        %872 = vmatprep.subr.mxu0 0.0
        %873 = vmatpush1.msra.mxu0 0.0
        %874 = vmatprep.subr.mxu0 0.0
        %875 = vmatpush1.msra.mxu0 0.0
        %876 = vmatprep.subr.mxu0 0.0
        %877 = vmatpush1.msra.mxu0 0.0
        %878 = vmatprep.subr.mxu0 0.0
        %879 = vmatpush1.msra.mxu0 0.0
        %880 = vmatprep.subr.mxu0 0.0
        %881 = vmatpush1.msra.mxu0 0.0
        %882 = vmatprep.subr.mxu0 0.0
        %883 = vmatpush1.msra.mxu0 0.0
        %884 = vmatprep.subr.mxu0 0.0
        %885 = vmatpush1.msra.mxu0 0.0
        %886 = vmatprep.subr.mxu0 0.0
        %887 = vmatpush1.msra.mxu0 0.0
        %888 = vmatprep.subr.mxu0 0.0
        %889 = vmatpush1.msra.mxu0 0.0
        %890 = vmatprep.subr.mxu0 0.0
        %891 = vmatpush1.msra.mxu0 0.0
        %892 = vmatprep.subr.mxu0 0.0
        %893 = vmatpush1.msra.mxu0 0.0
        %894 = vmatprep.subr.mxu0 0.0
        %895 = vmatpush1.msra.mxu0 0.0
        %896 = vmatprep.subr.mxu0 0.0
        %897 = vmatpush1.msra.mxu0 0.0
        %898 = vmatprep.subr.mxu0 0.0
        %899 = vmatpush1.msra.mxu0 0.0
        %900 = vmatprep.mubr.f32.mxu0 0.0
        %901 = vmatmul.mubr.f32.gmra.mrb[0].mxu0 %v819
        %v902 = vpop.f32.mrb[0].mxu0
        %v903 = vadd.f32 0.0, %v902
        %v904 = vpop.f32.mrb[0].mxu0
        %905 = vdwg.mxu0
        %v906 = vadd.f32 %v817, %v903
        %v907 = vld [vmem:[%s5] sm:$0x1]
        %v909 = vlaneseq
        %v910 = vshrl.u32 %v909, 7
        %v911 = vsub.s32 0, %v910
        %v912 = vrot.slane %v907, %v911
        %v914 = vadd.f32 %v906, %v912
        %v915 = vmax.f32 %v914, 0.0
        %916 = vst [vmem:[%s247] sm:$0xff] %v915
        %s917 = sand.u32 %s149, 1
        %s918 = scalar_lea.sflag [#allocation6], %s917
        %s919 = sand.u32 %s149, 1
        %s920 = smul.addr %s919, 8
        %s921 = scalar_lea.vmem [#allocation9], %s920
        // Predicated region
        $region86: #{tpu_custom_call.1} parent=39 // pred_check
          %p922 = pneg %p159
        $region87: #{tpu_custom_call.1} parent=39 // pred_check_branch
          %924 = sbr.rel (%p922) target = $region89
        $region88: #{tpu_custom_call.1} parent=39 // pred_region
          %s926 = ssub.s32 128, 128
          %927 = vsyncadd %s918, %s926
          %s928 = smul.addr %s26, 2
          %s929 = sadd.s32 %s27, %s928
          %s930 = smul.addr %s929, 128
          %s931 = scalar_lea.hbm %s6, %s930
          %s933 = sshll.u32 %s921, 4
          %s934 = int_to_ptr.vmem [resolvable:$true] %s933
          %936 = dma.vmem_to_hbm [thread:$0]  %s934, 128, %s931, %s918
        $region89: #{tpu_custom_call.1} parent=39 // pred_fallthru
          _
      $region40: #{tpu_custom_call.1} parent=5 // pred_fallthru
        _
      %p937 = scmp.le.s32.totalorder 2, %s17
      // Predicated region
      $region90: #{tpu_custom_call.1} parent=5 // pred_check
        %p938 = pneg %p937
      $region91: #{tpu_custom_call.1} parent=5 // pred_check_branch
        %940 = sbr.rel (%p938) target = $region93
      $region92: #{tpu_custom_call.1} parent=5 // pred_region
        %s941 = ssub.s32 %s17, 2
        // Predicated region
        $region94: #{tpu_custom_call.1} parent=92 // pred_check
          %p942 = pneg %p165
        $region95: #{tpu_custom_call.1} parent=92 // pred_check_branch
          %944 = sbr.rel (%p942) target = $region97
        $region96: #{tpu_custom_call.1} parent=92 // pred_region
          %s945 = sand.u32 %s150, 1
          %s946 = scalar_lea.sflag [#allocation6], %s945
          %s947 = sand.u32 %s150, 1
          %s948 = smul.addr %s947, 8
          %s949 = scalar_lea.vmem [#allocation9], %s948
          %950 = dma.done %s946, 128
        $region97: #{tpu_custom_call.1} parent=92 // pred_fallthru
          _
      $region93: #{tpu_custom_call.1} parent=5 // pred_fallthru
        _
    $region6: #{tpu_custom_call.1} parent=1 // loop_footer
      %s21 = sadd.s32 1, %s17
    $region7: #{tpu_custom_call.1} parent=1 // loop_footer_branch
      %16 = sbr.rel target = $region3
    $region8: #{tpu_custom_call.1} parent=1 // loop_exit
      _
    %951 = vsyncpa [#allocation5], 1
    %s952 = scalar_lea.sflag [#allocation5], 1
    %953 = vsyncpa %s952, 1
    %954 = vsyncpa [#allocation8], 1
    %955 = vsyncpa [#allocation6], 1
    %s956 = scalar_lea.sflag [#allocation6], 1
    %957 = vsyncpa %s956, 1
  %958 = vsyncmov [#allocation3]
  %s959 = vpop.sfrf %958
  %p960 = scmp.eq.s32.totalorder %s959, 0
  %p961 = pneg %p960
  %963 = shalt.err (%p961)

</llo_original>
